<compile_context>
chip_gen: v6e
topology: v6e:2x2x1
jax: 0.10.0
libtpu: 0.0.40
codegen_flags: <defaults>
</compile_context>

<pallas_src>
import numpy as np
import jax
import jax.numpy as jnp
from jax.experimental import pallas as pl
from jax.experimental.pallas import tpu as pltpu

THRESH_DIST = 0.02
INV_THRESH = 1.0 / THRESH_DIST      # fold /thresh into pre-scaled coordinates
RSQRT_EPS = 1e-30                   # guard d2=0 for the rsqrt trick


# ----------------------------- Pallas kernel -------------------------------
def prob_kernel(t_ref, gx_ref, gy_ref, gz_ref, w_ref, near_ref, out_ref):
    # t_ref    : (12, TN)  VMEM  top 3x4 rows of the composed pose, pre-scaled
    #                            by 1/thresh, row-major, batch on lanes
    # gx/gy/gz : (G, TN)   VMEM  gripper xyz (probe rows then collision rows)
    # w_ref    : (G, 1)    VMEM  per-row weight (-0.001/2 probe, +0.01/2 coll)
    # near_ref : (3*M,)    SMEM  near points, pre-scaled by 1/thresh,
    #                            layout [x0..x_{M-1}, y0.., z0..]
    # out_ref  : (1, TN)         per-point loss, lane-dense
    t = t_ref[...]
    gx = gx_ref[...]
    gy = gy_ref[...]
    gz = gz_ref[...]

    # Rigid transform on the VPU: broadcast FMAs + translation per axis.
    # (Coordinates come out pre-scaled by 1/thresh.)
    x = gx * t[0:1, :] + gy * t[1:2, :] + gz * t[2:3, :] + t[3:4, :]
    y = gx * t[4:5, :] + gy * t[5:6, :] + gz * t[6:7, :] + t[7:8, :]
    z = gx * t[8:9, :] + gy * t[9:10, :] + gz * t[10:11, :] + t[11:12, :]

    m = near_ref.shape[0] // 3

    def body(i, acc):
        # Scalar near-point coordinates splatted from SMEM (no lane shuffles).
        nx = near_ref[i]
        ny = near_ref[m + i]
        nz = near_ref[2 * m + i]
        dx = x - nx
        dy = y - ny
        dz = z - nz
        d2 = dx * dx + dy * dy + dz * dz                 # exact difference
        d = d2 * jax.lax.rsqrt(d2 + RSQRT_EPS)           # = |diff| (scaled)
        return acc + jnp.exp(-d)                         # exp(-dist/thresh)

    per_row = jax.lax.fori_loop(0, m, body, jnp.zeros_like(gx),
                                unroll=min(m, 8))        # (G, TN)

    # Weighted reduce over gripper rows -> lane-dense (1, TN) loss row.
    out_ref[...] = jnp.sum(per_row * w_ref[...], axis=0, keepdims=True)


def prob_forward(trans, probe_pts, collision_pts, near_pts, *, tile_n=128):
    """trans: (n,4,4); probe/coll: (n,P,4)/(n,C,4) homogeneous (w=1);
    near_pts: (M,3) shared across the batch (k=0 path of the module).

    tile_n=128 keeps x/y/z/acc fully vreg-resident for G ~ tens of rows;
    sweep 256 on v6e for large n, and keep tile_n <= n_pad/2 on v7x so the
    "parallel" batch axis shards across both TensorCores.
    """
    # TODO(synk): the k>0 branch of the module uses a different near set per
    # point; this kernel implements the shared-near (k=0) path only.
    n = trans.shape[0]
    p = probe_pts.shape[1]
    c = collision_pts.shape[1]
    m = near_pts.shape[0]
    g = p + c

    n_lane = ((n + 7) // 8) * 8
    tn = int(min(tile_n, n_lane))
    n_pad = ((n + tn - 1) // tn) * tn

    def pad_last(a):
        extra = n_pad - a.shape[-1]
        return a if extra == 0 else jnp.pad(a, [(0, 0)] * (a.ndim - 1) + [(0, extra)])

    # Batch-on-lanes layout; fold 1/thresh into the pose coefficients.
    t_t = pad_last((trans[:, :3, :].reshape(n, 12).T * INV_THRESH)
                   .astype(jnp.float32))                                     # (12, n_pad)
    grip = jnp.concatenate([probe_pts, collision_pts], axis=1).astype(jnp.float32)
    gx_t = pad_last(grip[:, :, 0].T)                                         # (G, n_pad)
    gy_t = pad_last(grip[:, :, 1].T)
    gz_t = pad_last(grip[:, :, 2].T)

    # Probe / collision weights with the 1/2 and loss coefficients folded in.
    w = jnp.concatenate([jnp.full((p, 1), -0.001 * 0.5, jnp.float32),
                         jnp.full((c, 1), 0.01 * 0.5, jnp.float32)], axis=0)  # (G, 1)

    # Shared near set, flat f32 in SMEM ([all x | all y | all z]), pre-scaled.
    near_flat = (near_pts.astype(jnp.float32) * INV_THRESH).T.reshape(-1)     # (3*M,)

    out = pl.pallas_call(
        prob_kernel,
        out_shape=jax.ShapeDtypeStruct((1, n_pad), jnp.float32),
        grid_spec=pltpu.PrefetchScalarGridSpec(
            num_scalar_prefetch=0,
            grid=(n_pad // tn,),
            in_specs=[
                pl.BlockSpec((12, tn), lambda i: (0, i)),
                pl.BlockSpec((g, tn), lambda i: (0, i)),
                pl.BlockSpec((g, tn), lambda i: (0, i)),
                pl.BlockSpec((g, tn), lambda i: (0, i)),
                pl.BlockSpec((g, 1), lambda i: (0, 0)),               # resident
                pl.BlockSpec(memory_space=pltpu.MemorySpace.SMEM),    # near pts
            ],
            out_specs=pl.BlockSpec((1, tn), lambda i: (0, i)),
        ),
        compiler_params=pltpu.CompilerParams(
            dimension_semantics=("parallel",),
            vmem_limit_bytes=32 * 1024 * 1024),
    )(t_t, gx_t, gy_t, gz_t, w, near_flat)
    return out[0, :n]


# ------------------------- plain-JAX parameter glue -------------------------
def build_trans(initial_trans, long_dist, roll_angle):
    """trans[:,2,3]=long_dist; trans[:,:3,:3]=R_z(roll); trans[:,3,3]=1;
    then initial_trans @ trans (batched 4x4 composition)."""
    cth = jnp.cos(roll_angle)
    sth = jnp.sin(roll_angle)
    z = jnp.zeros_like(cth)
    o = jnp.ones_like(cth)
    local = jnp.stack([
        jnp.stack([cth, -sth, z, z], axis=-1),
        jnp.stack([sth, cth, z, z], axis=-1),
        jnp.stack([z, z, o, long_dist], axis=-1),
        jnp.stack([z, z, z, o], axis=-1),
    ], axis=-2)                                           # (n, 4, 4)
    return jnp.einsum('nij,njk->nik', initial_trans, local).astype(jnp.float32)


def rot_align_z_to(b):
    """Minimal-angle rotation R with R @ [0,0,1] ~= b (unit vectors), Rodrigues.
    Stands in for scipy Rotation.align_vectors in the reference __init__."""
    b = np.asarray(b, dtype=np.float64)
    a = np.array([0.0, 0.0, 1.0])
    v = np.cross(np.broadcast_to(a, b.shape), b)          # (n, 3)
    c = b[:, 2]                                           # a . b
    vx = np.zeros((b.shape[0], 3, 3), dtype=np.float64)
    vx[:, 0, 1] = -v[:, 2]; vx[:, 0, 2] = v[:, 1]
    vx[:, 1, 0] = v[:, 2];  vx[:, 1, 2] = -v[:, 0]
    vx[:, 2, 0] = -v[:, 1]; vx[:, 2, 1] = v[:, 0]
    factor = 1.0 / (1.0 + c + 1e-12)
    return np.eye(3)[None] + vx + (vx @ vx) * factor[:, None, None]


# ----------------------------------- main -----------------------------------
if __name__ == "__main__":
    key = jax.random.PRNGKey(0)
    ks = jax.random.split(key, 8)
    n, n_probe, n_coll = 8, 16, 16          # small synthetic problem

    # "Checkpoint" state, deterministic from PRNGKey(0)
    pts = (jax.random.normal(ks[0], (n, 3)) * 0.1).astype(jnp.float32)
    normals_raw = jax.random.normal(ks[1], (n, 3))
    normals = (normals_raw /
               jnp.linalg.norm(normals_raw, axis=-1, keepdims=True)).astype(jnp.float32)
    long_dist = (-0.12 + 1e-6 * jax.random.normal(ks[2], (n,))).astype(jnp.float32)
    roll_angle = (1e-6 * jax.random.normal(ks[3], (n,))).astype(jnp.float32)

    # k = 0 path: the shared near set is the surface points themselves --
    # passed once, never broadcast to (n, n, 3).
    near_pts = pts

    # initial_trans: rotation aligning +z to -normal, translation = pts[i]
    R_np = rot_align_z_to(-np.asarray(normals))
    init_trans = np.tile(np.eye(4, dtype=np.float64), (n, 1, 1))
    init_trans[:, :3, :3] = R_np
    init_trans[:, :3, 3] = np.asarray(pts, dtype=np.float64)
    init_trans = jnp.asarray(init_trans, dtype=jnp.float32)

    # Forward inputs: homogeneous gripper point clouds (w = 1)
    probe_xyz = jax.random.normal(ks[4], (n, n_probe, 3)) * 0.05
    coll_xyz = jax.random.normal(ks[5], (n, n_coll, 3)) * 0.05
    probe_pts = jnp.concatenate(
        [probe_xyz, jnp.ones((n, n_probe, 1))], axis=-1).astype(jnp.float32)
    collision_pts = jnp.concatenate(
        [coll_xyz, jnp.ones((n, n_coll, 1))], axis=-1).astype(jnp.float32)

    # Compose poses (glue), then run the Pallas hot path
    trans = build_trans(init_trans, long_dist, roll_angle)
    loss = prob_forward(trans, probe_pts, collision_pts, near_pts)
    loss = jax.block_until_ready(loss)

    # Pure-JAX reference (exact-difference cdist, shared near) for sanity check
    def ref_forward(trans, probe, coll, near):
        def act(pts_h):
            xyz = jnp.einsum('nij,npj->npi', trans, pts_h)[..., :3]
            d = jnp.sqrt(jnp.sum(
                (xyz[:, :, None, :] - near[None, None, :, :]) ** 2, axis=-1))
            return jnp.sum(jnp.exp(-d / THRESH_DIST), axis=(1, 2)) / 2.0
        return -0.001 * act(probe) + 0.01 * act(coll)

    ref = jax.block_until_ready(
        ref_forward(trans, probe_pts, collision_pts, near_pts))
    np.testing.assert_allclose(np.asarray(loss), np.asarray(ref),
                               rtol=1e-3, atol=1e-4)
    print("KERNEL_OK")
</pallas_src>

<mosaic_0001>
module attributes {stable_mosaic.version = 11 : i64} {
  func.func @prob_kernel(%arg0: i32, %arg1: memref<12x8xf32, #tpu.memory_space<vmem>>, %arg2: memref<32x8xf32, #tpu.memory_space<vmem>>, %arg3: memref<32x8xf32, #tpu.memory_space<vmem>>, %arg4: memref<32x8xf32, #tpu.memory_space<vmem>>, %arg5: memref<32x1xf32, #tpu.memory_space<vmem>>, %arg6: memref<24xf32, #tpu.memory_space<smem>>, %arg7: memref<1x8xf32, #tpu.memory_space<vmem>>) attributes {dimension_semantics = [#tpu.dimension_semantics<parallel>], iteration_bounds = array<i64: 1>, scalar_prefetch = 0 : i64, scratch_operands = 0 : i64, tpu.core_type = #tpu.core_type<tc>, window_params = [{transform_indices = @transform_0, window_bounds = array<i64: 12, 8>}, {transform_indices = @transform_1, window_bounds = array<i64: 32, 8>}, {transform_indices = @transform_2, window_bounds = array<i64: 32, 8>}, {transform_indices = @transform_3, window_bounds = array<i64: 32, 8>}, {pipeline_mode = #tpu.pipeline_mode<synchronous>, transform_indices = @transform_4, window_bounds = array<i64: 32, 1>}, {transform_indices = @transform_5, window_bounds = array<i64: 24>}, {transform_indices = @transform_6, window_bounds = array<i64: 1, 8>}]} {
    %c0 = arith.constant 0 : index
    %c0_0 = arith.constant 0 : index
    %0 = vector.load %arg1[%c0, %c0_0] : memref<12x8xf32, #tpu.memory_space<vmem>>, vector<12x8xf32>
    %c0_1 = arith.constant 0 : index
    %c0_2 = arith.constant 0 : index
    %1 = vector.load %arg2[%c0_1, %c0_2] : memref<32x8xf32, #tpu.memory_space<vmem>>, vector<32x8xf32>
    %c0_3 = arith.constant 0 : index
    %c0_4 = arith.constant 0 : index
    %2 = vector.load %arg3[%c0_3, %c0_4] : memref<32x8xf32, #tpu.memory_space<vmem>>, vector<32x8xf32>
    %c0_5 = arith.constant 0 : index
    %c0_6 = arith.constant 0 : index
    %3 = vector.load %arg4[%c0_5, %c0_6] : memref<32x8xf32, #tpu.memory_space<vmem>>, vector<32x8xf32>
    %4 = vector.extract_strided_slice %0 {offsets = [0, 0], sizes = [1, 8], strides = [1, 1]} : vector<12x8xf32> to vector<1x8xf32>
    %5 = vector.broadcast %4 : vector<1x8xf32> to vector<32x8xf32>
    %6 = arith.mulf %1, %5 : vector<32x8xf32>
    %7 = vector.extract_strided_slice %0 {offsets = [1, 0], sizes = [1, 8], strides = [1, 1]} : vector<12x8xf32> to vector<1x8xf32>
    %8 = vector.broadcast %7 : vector<1x8xf32> to vector<32x8xf32>
    %9 = arith.mulf %2, %8 : vector<32x8xf32>
    %10 = arith.addf %6, %9 : vector<32x8xf32>
    %11 = vector.extract_strided_slice %0 {offsets = [2, 0], sizes = [1, 8], strides = [1, 1]} : vector<12x8xf32> to vector<1x8xf32>
    %12 = vector.broadcast %11 : vector<1x8xf32> to vector<32x8xf32>
    %13 = arith.mulf %3, %12 : vector<32x8xf32>
    %14 = arith.addf %10, %13 : vector<32x8xf32>
    %15 = vector.extract_strided_slice %0 {offsets = [3, 0], sizes = [1, 8], strides = [1, 1]} : vector<12x8xf32> to vector<1x8xf32>
    %16 = vector.broadcast %15 : vector<1x8xf32> to vector<32x8xf32>
    %17 = arith.addf %14, %16 : vector<32x8xf32>
    %18 = vector.extract_strided_slice %0 {offsets = [4, 0], sizes = [1, 8], strides = [1, 1]} : vector<12x8xf32> to vector<1x8xf32>
    %19 = vector.broadcast %18 : vector<1x8xf32> to vector<32x8xf32>
    %20 = arith.mulf %1, %19 : vector<32x8xf32>
    %21 = vector.extract_strided_slice %0 {offsets = [5, 0], sizes = [1, 8], strides = [1, 1]} : vector<12x8xf32> to vector<1x8xf32>
    %22 = vector.broadcast %21 : vector<1x8xf32> to vector<32x8xf32>
    %23 = arith.mulf %2, %22 : vector<32x8xf32>
    %24 = arith.addf %20, %23 : vector<32x8xf32>
    %25 = vector.extract_strided_slice %0 {offsets = [6, 0], sizes = [1, 8], strides = [1, 1]} : vector<12x8xf32> to vector<1x8xf32>
    %26 = vector.broadcast %25 : vector<1x8xf32> to vector<32x8xf32>
    %27 = arith.mulf %3, %26 : vector<32x8xf32>
    %28 = arith.addf %24, %27 : vector<32x8xf32>
    %29 = vector.extract_strided_slice %0 {offsets = [7, 0], sizes = [1, 8], strides = [1, 1]} : vector<12x8xf32> to vector<1x8xf32>
    %30 = vector.broadcast %29 : vector<1x8xf32> to vector<32x8xf32>
    %31 = arith.addf %28, %30 : vector<32x8xf32>
    %32 = vector.extract_strided_slice %0 {offsets = [8, 0], sizes = [1, 8], strides = [1, 1]} : vector<12x8xf32> to vector<1x8xf32>
    %33 = vector.broadcast %32 : vector<1x8xf32> to vector<32x8xf32>
    %34 = arith.mulf %1, %33 : vector<32x8xf32>
    %35 = vector.extract_strided_slice %0 {offsets = [9, 0], sizes = [1, 8], strides = [1, 1]} : vector<12x8xf32> to vector<1x8xf32>
    %36 = vector.broadcast %35 : vector<1x8xf32> to vector<32x8xf32>
    %37 = arith.mulf %2, %36 : vector<32x8xf32>
    %38 = arith.addf %34, %37 : vector<32x8xf32>
    %39 = vector.extract_strided_slice %0 {offsets = [10, 0], sizes = [1, 8], strides = [1, 1]} : vector<12x8xf32> to vector<1x8xf32>
    %40 = vector.broadcast %39 : vector<1x8xf32> to vector<32x8xf32>
    %41 = arith.mulf %3, %40 : vector<32x8xf32>
    %42 = arith.addf %38, %41 : vector<32x8xf32>
    %43 = vector.extract_strided_slice %0 {offsets = [11, 0], sizes = [1, 8], strides = [1, 1]} : vector<12x8xf32> to vector<1x8xf32>
    %44 = vector.broadcast %43 : vector<1x8xf32> to vector<32x8xf32>
    %45 = arith.addf %42, %44 : vector<32x8xf32>
    %cst = arith.constant 0.000000e+00 : f32
    %46 = vector.broadcast %cst : f32 to vector<32x8xf32>
    %c0_i32 = arith.constant 0 : i32
    %47 = arith.index_cast %c0_i32 : i32 to index
    %48 = memref.load %arg6[%47] : memref<24xf32, #tpu.memory_space<smem>>
    %c8_i32 = arith.constant 8 : i32
    %49 = arith.addi %c8_i32, %c0_i32 : i32
    %50 = arith.index_cast %49 : i32 to index
    %51 = memref.load %arg6[%50] : memref<24xf32, #tpu.memory_space<smem>>
    %c16_i32 = arith.constant 16 : i32
    %52 = arith.addi %c16_i32, %c0_i32 : i32
    %53 = arith.index_cast %52 : i32 to index
    %54 = memref.load %arg6[%53] : memref<24xf32, #tpu.memory_space<smem>>
    %55 = vector.broadcast %48 : f32 to vector<32x8xf32>
    %56 = arith.subf %17, %55 : vector<32x8xf32>
    %57 = vector.broadcast %51 : f32 to vector<32x8xf32>
    %58 = arith.subf %31, %57 : vector<32x8xf32>
    %59 = vector.broadcast %54 : f32 to vector<32x8xf32>
    %60 = arith.subf %45, %59 : vector<32x8xf32>
    %61 = arith.mulf %56, %56 : vector<32x8xf32>
    %62 = arith.mulf %58, %58 : vector<32x8xf32>
    %63 = arith.addf %61, %62 : vector<32x8xf32>
    %64 = arith.mulf %60, %60 : vector<32x8xf32>
    %65 = arith.addf %63, %64 : vector<32x8xf32>
    %cst_7 = arith.constant 1.000000e-30 : f32
    %66 = vector.broadcast %cst_7 : f32 to vector<32x8xf32>
    %67 = arith.addf %65, %66 : vector<32x8xf32>
    %68 = math.rsqrt %67 : vector<32x8xf32>
    %69 = arith.mulf %65, %68 : vector<32x8xf32>
    %cst_8 = arith.constant 0.000000e+00 : f32
    %70 = vector.broadcast %cst_8 : f32 to vector<32x8xf32>
    %71 = arith.subf %70, %69 : vector<32x8xf32>
    %72 = math.exp %71 : vector<32x8xf32>
    %73 = arith.addf %46, %72 : vector<32x8xf32>
    %c1_i32 = arith.constant 1 : i32
    %74 = arith.index_cast %c1_i32 : i32 to index
    %75 = memref.load %arg6[%74] : memref<24xf32, #tpu.memory_space<smem>>
    %c8_i32_9 = arith.constant 8 : i32
    %76 = arith.addi %c8_i32_9, %c1_i32 : i32
    %77 = arith.index_cast %76 : i32 to index
    %78 = memref.load %arg6[%77] : memref<24xf32, #tpu.memory_space<smem>>
    %c16_i32_10 = arith.constant 16 : i32
    %79 = arith.addi %c16_i32_10, %c1_i32 : i32
    %80 = arith.index_cast %79 : i32 to index
    %81 = memref.load %arg6[%80] : memref<24xf32, #tpu.memory_space<smem>>
    %82 = vector.broadcast %75 : f32 to vector<32x8xf32>
    %83 = arith.subf %17, %82 : vector<32x8xf32>
    %84 = vector.broadcast %78 : f32 to vector<32x8xf32>
    %85 = arith.subf %31, %84 : vector<32x8xf32>
    %86 = vector.broadcast %81 : f32 to vector<32x8xf32>
    %87 = arith.subf %45, %86 : vector<32x8xf32>
    %88 = arith.mulf %83, %83 : vector<32x8xf32>
    %89 = arith.mulf %85, %85 : vector<32x8xf32>
    %90 = arith.addf %88, %89 : vector<32x8xf32>
    %91 = arith.mulf %87, %87 : vector<32x8xf32>
    %92 = arith.addf %90, %91 : vector<32x8xf32>
    %cst_11 = arith.constant 1.000000e-30 : f32
    %93 = vector.broadcast %cst_11 : f32 to vector<32x8xf32>
    %94 = arith.addf %92, %93 : vector<32x8xf32>
    %95 = math.rsqrt %94 : vector<32x8xf32>
    %96 = arith.mulf %92, %95 : vector<32x8xf32>
    %cst_12 = arith.constant 0.000000e+00 : f32
    %97 = vector.broadcast %cst_12 : f32 to vector<32x8xf32>
    %98 = arith.subf %97, %96 : vector<32x8xf32>
    %99 = math.exp %98 : vector<32x8xf32>
    %100 = arith.addf %73, %99 : vector<32x8xf32>
    %c2_i32 = arith.constant 2 : i32
    %101 = arith.index_cast %c2_i32 : i32 to index
    %102 = memref.load %arg6[%101] : memref<24xf32, #tpu.memory_space<smem>>
    %c8_i32_13 = arith.constant 8 : i32
    %103 = arith.addi %c8_i32_13, %c2_i32 : i32
    %104 = arith.index_cast %103 : i32 to index
    %105 = memref.load %arg6[%104] : memref<24xf32, #tpu.memory_space<smem>>
    %c16_i32_14 = arith.constant 16 : i32
    %106 = arith.addi %c16_i32_14, %c2_i32 : i32
    %107 = arith.index_cast %106 : i32 to index
    %108 = memref.load %arg6[%107] : memref<24xf32, #tpu.memory_space<smem>>
    %109 = vector.broadcast %102 : f32 to vector<32x8xf32>
    %110 = arith.subf %17, %109 : vector<32x8xf32>
    %111 = vector.broadcast %105 : f32 to vector<32x8xf32>
    %112 = arith.subf %31, %111 : vector<32x8xf32>
    %113 = vector.broadcast %108 : f32 to vector<32x8xf32>
    %114 = arith.subf %45, %113 : vector<32x8xf32>
    %115 = arith.mulf %110, %110 : vector<32x8xf32>
    %116 = arith.mulf %112, %112 : vector<32x8xf32>
    %117 = arith.addf %115, %116 : vector<32x8xf32>
    %118 = arith.mulf %114, %114 : vector<32x8xf32>
    %119 = arith.addf %117, %118 : vector<32x8xf32>
    %cst_15 = arith.constant 1.000000e-30 : f32
    %120 = vector.broadcast %cst_15 : f32 to vector<32x8xf32>
    %121 = arith.addf %119, %120 : vector<32x8xf32>
    %122 = math.rsqrt %121 : vector<32x8xf32>
    %123 = arith.mulf %119, %122 : vector<32x8xf32>
    %cst_16 = arith.constant 0.000000e+00 : f32
    %124 = vector.broadcast %cst_16 : f32 to vector<32x8xf32>
    %125 = arith.subf %124, %123 : vector<32x8xf32>
    %126 = math.exp %125 : vector<32x8xf32>
    %127 = arith.addf %100, %126 : vector<32x8xf32>
    %c3_i32 = arith.constant 3 : i32
    %128 = arith.index_cast %c3_i32 : i32 to index
    %129 = memref.load %arg6[%128] : memref<24xf32, #tpu.memory_space<smem>>
    %c8_i32_17 = arith.constant 8 : i32
    %130 = arith.addi %c8_i32_17, %c3_i32 : i32
    %131 = arith.index_cast %130 : i32 to index
    %132 = memref.load %arg6[%131] : memref<24xf32, #tpu.memory_space<smem>>
    %c16_i32_18 = arith.constant 16 : i32
    %133 = arith.addi %c16_i32_18, %c3_i32 : i32
    %134 = arith.index_cast %133 : i32 to index
    %135 = memref.load %arg6[%134] : memref<24xf32, #tpu.memory_space<smem>>
    %136 = vector.broadcast %129 : f32 to vector<32x8xf32>
    %137 = arith.subf %17, %136 : vector<32x8xf32>
    %138 = vector.broadcast %132 : f32 to vector<32x8xf32>
    %139 = arith.subf %31, %138 : vector<32x8xf32>
    %140 = vector.broadcast %135 : f32 to vector<32x8xf32>
    %141 = arith.subf %45, %140 : vector<32x8xf32>
    %142 = arith.mulf %137, %137 : vector<32x8xf32>
    %143 = arith.mulf %139, %139 : vector<32x8xf32>
    %144 = arith.addf %142, %143 : vector<32x8xf32>
    %145 = arith.mulf %141, %141 : vector<32x8xf32>
    %146 = arith.addf %144, %145 : vector<32x8xf32>
    %cst_19 = arith.constant 1.000000e-30 : f32
    %147 = vector.broadcast %cst_19 : f32 to vector<32x8xf32>
    %148 = arith.addf %146, %147 : vector<32x8xf32>
    %149 = math.rsqrt %148 : vector<32x8xf32>
    %150 = arith.mulf %146, %149 : vector<32x8xf32>
    %cst_20 = arith.constant 0.000000e+00 : f32
    %151 = vector.broadcast %cst_20 : f32 to vector<32x8xf32>
    %152 = arith.subf %151, %150 : vector<32x8xf32>
    %153 = math.exp %152 : vector<32x8xf32>
    %154 = arith.addf %127, %153 : vector<32x8xf32>
    %c4_i32 = arith.constant 4 : i32
    %155 = arith.index_cast %c4_i32 : i32 to index
    %156 = memref.load %arg6[%155] : memref<24xf32, #tpu.memory_space<smem>>
    %c8_i32_21 = arith.constant 8 : i32
    %157 = arith.addi %c8_i32_21, %c4_i32 : i32
    %158 = arith.index_cast %157 : i32 to index
    %159 = memref.load %arg6[%158] : memref<24xf32, #tpu.memory_space<smem>>
    %c16_i32_22 = arith.constant 16 : i32
    %160 = arith.addi %c16_i32_22, %c4_i32 : i32
    %161 = arith.index_cast %160 : i32 to index
    %162 = memref.load %arg6[%161] : memref<24xf32, #tpu.memory_space<smem>>
    %163 = vector.broadcast %156 : f32 to vector<32x8xf32>
    %164 = arith.subf %17, %163 : vector<32x8xf32>
    %165 = vector.broadcast %159 : f32 to vector<32x8xf32>
    %166 = arith.subf %31, %165 : vector<32x8xf32>
    %167 = vector.broadcast %162 : f32 to vector<32x8xf32>
    %168 = arith.subf %45, %167 : vector<32x8xf32>
    %169 = arith.mulf %164, %164 : vector<32x8xf32>
    %170 = arith.mulf %166, %166 : vector<32x8xf32>
    %171 = arith.addf %169, %170 : vector<32x8xf32>
    %172 = arith.mulf %168, %168 : vector<32x8xf32>
    %173 = arith.addf %171, %172 : vector<32x8xf32>
    %cst_23 = arith.constant 1.000000e-30 : f32
    %174 = vector.broadcast %cst_23 : f32 to vector<32x8xf32>
    %175 = arith.addf %173, %174 : vector<32x8xf32>
    %176 = math.rsqrt %175 : vector<32x8xf32>
    %177 = arith.mulf %173, %176 : vector<32x8xf32>
    %cst_24 = arith.constant 0.000000e+00 : f32
    %178 = vector.broadcast %cst_24 : f32 to vector<32x8xf32>
    %179 = arith.subf %178, %177 : vector<32x8xf32>
    %180 = math.exp %179 : vector<32x8xf32>
    %181 = arith.addf %154, %180 : vector<32x8xf32>
    %c5_i32 = arith.constant 5 : i32
    %182 = arith.index_cast %c5_i32 : i32 to index
    %183 = memref.load %arg6[%182] : memref<24xf32, #tpu.memory_space<smem>>
    %c8_i32_25 = arith.constant 8 : i32
    %184 = arith.addi %c8_i32_25, %c5_i32 : i32
    %185 = arith.index_cast %184 : i32 to index
    %186 = memref.load %arg6[%185] : memref<24xf32, #tpu.memory_space<smem>>
    %c16_i32_26 = arith.constant 16 : i32
    %187 = arith.addi %c16_i32_26, %c5_i32 : i32
    %188 = arith.index_cast %187 : i32 to index
    %189 = memref.load %arg6[%188] : memref<24xf32, #tpu.memory_space<smem>>
    %190 = vector.broadcast %183 : f32 to vector<32x8xf32>
    %191 = arith.subf %17, %190 : vector<32x8xf32>
    %192 = vector.broadcast %186 : f32 to vector<32x8xf32>
    %193 = arith.subf %31, %192 : vector<32x8xf32>
    %194 = vector.broadcast %189 : f32 to vector<32x8xf32>
    %195 = arith.subf %45, %194 : vector<32x8xf32>
    %196 = arith.mulf %191, %191 : vector<32x8xf32>
    %197 = arith.mulf %193, %193 : vector<32x8xf32>
    %198 = arith.addf %196, %197 : vector<32x8xf32>
    %199 = arith.mulf %195, %195 : vector<32x8xf32>
    %200 = arith.addf %198, %199 : vector<32x8xf32>
    %cst_27 = arith.constant 1.000000e-30 : f32
    %201 = vector.broadcast %cst_27 : f32 to vector<32x8xf32>
    %202 = arith.addf %200, %201 : vector<32x8xf32>
    %203 = math.rsqrt %202 : vector<32x8xf32>
    %204 = arith.mulf %200, %203 : vector<32x8xf32>
    %cst_28 = arith.constant 0.000000e+00 : f32
    %205 = vector.broadcast %cst_28 : f32 to vector<32x8xf32>
    %206 = arith.subf %205, %204 : vector<32x8xf32>
    %207 = math.exp %206 : vector<32x8xf32>
    %208 = arith.addf %181, %207 : vector<32x8xf32>
    %c6_i32 = arith.constant 6 : i32
    %209 = arith.index_cast %c6_i32 : i32 to index
    %210 = memref.load %arg6[%209] : memref<24xf32, #tpu.memory_space<smem>>
    %c8_i32_29 = arith.constant 8 : i32
    %211 = arith.addi %c8_i32_29, %c6_i32 : i32
    %212 = arith.index_cast %211 : i32 to index
    %213 = memref.load %arg6[%212] : memref<24xf32, #tpu.memory_space<smem>>
    %c16_i32_30 = arith.constant 16 : i32
    %214 = arith.addi %c16_i32_30, %c6_i32 : i32
    %215 = arith.index_cast %214 : i32 to index
    %216 = memref.load %arg6[%215] : memref<24xf32, #tpu.memory_space<smem>>
    %217 = vector.broadcast %210 : f32 to vector<32x8xf32>
    %218 = arith.subf %17, %217 : vector<32x8xf32>
    %219 = vector.broadcast %213 : f32 to vector<32x8xf32>
    %220 = arith.subf %31, %219 : vector<32x8xf32>
    %221 = vector.broadcast %216 : f32 to vector<32x8xf32>
    %222 = arith.subf %45, %221 : vector<32x8xf32>
    %223 = arith.mulf %218, %218 : vector<32x8xf32>
    %224 = arith.mulf %220, %220 : vector<32x8xf32>
    %225 = arith.addf %223, %224 : vector<32x8xf32>
    %226 = arith.mulf %222, %222 : vector<32x8xf32>
    %227 = arith.addf %225, %226 : vector<32x8xf32>
    %cst_31 = arith.constant 1.000000e-30 : f32
    %228 = vector.broadcast %cst_31 : f32 to vector<32x8xf32>
    %229 = arith.addf %227, %228 : vector<32x8xf32>
    %230 = math.rsqrt %229 : vector<32x8xf32>
    %231 = arith.mulf %227, %230 : vector<32x8xf32>
    %cst_32 = arith.constant 0.000000e+00 : f32
    %232 = vector.broadcast %cst_32 : f32 to vector<32x8xf32>
    %233 = arith.subf %232, %231 : vector<32x8xf32>
    %234 = math.exp %233 : vector<32x8xf32>
    %235 = arith.addf %208, %234 : vector<32x8xf32>
    %c7_i32 = arith.constant 7 : i32
    %236 = arith.index_cast %c7_i32 : i32 to index
    %237 = memref.load %arg6[%236] : memref<24xf32, #tpu.memory_space<smem>>
    %c8_i32_33 = arith.constant 8 : i32
    %238 = arith.addi %c8_i32_33, %c7_i32 : i32
    %239 = arith.index_cast %238 : i32 to index
    %240 = memref.load %arg6[%239] : memref<24xf32, #tpu.memory_space<smem>>
    %c16_i32_34 = arith.constant 16 : i32
    %241 = arith.addi %c16_i32_34, %c7_i32 : i32
    %242 = arith.index_cast %241 : i32 to index
    %243 = memref.load %arg6[%242] : memref<24xf32, #tpu.memory_space<smem>>
    %244 = vector.broadcast %237 : f32 to vector<32x8xf32>
    %245 = arith.subf %17, %244 : vector<32x8xf32>
    %246 = vector.broadcast %240 : f32 to vector<32x8xf32>
    %247 = arith.subf %31, %246 : vector<32x8xf32>
    %248 = vector.broadcast %243 : f32 to vector<32x8xf32>
    %249 = arith.subf %45, %248 : vector<32x8xf32>
    %250 = arith.mulf %245, %245 : vector<32x8xf32>
    %251 = arith.mulf %247, %247 : vector<32x8xf32>
    %252 = arith.addf %250, %251 : vector<32x8xf32>
    %253 = arith.mulf %249, %249 : vector<32x8xf32>
    %254 = arith.addf %252, %253 : vector<32x8xf32>
    %cst_35 = arith.constant 1.000000e-30 : f32
    %255 = vector.broadcast %cst_35 : f32 to vector<32x8xf32>
    %256 = arith.addf %254, %255 : vector<32x8xf32>
    %257 = math.rsqrt %256 : vector<32x8xf32>
    %258 = arith.mulf %254, %257 : vector<32x8xf32>
    %cst_36 = arith.constant 0.000000e+00 : f32
    %259 = vector.broadcast %cst_36 : f32 to vector<32x8xf32>
    %260 = arith.subf %259, %258 : vector<32x8xf32>
    %261 = math.exp %260 : vector<32x8xf32>
    %262 = arith.addf %235, %261 : vector<32x8xf32>
    %c8_i32_37 = arith.constant 8 : i32
    %c0_38 = arith.constant 0 : index
    %c0_39 = arith.constant 0 : index
    %263 = vector.load %arg5[%c0_38, %c0_39] : memref<32x1xf32, #tpu.memory_space<vmem>>, vector<32x1xf32>
    %264 = vector.broadcast %263 : vector<32x1xf32> to vector<32x8xf32>
    %265 = arith.mulf %262, %264 : vector<32x8xf32>
    %cst_40 = arith.constant dense<0.000000e+00> : vector<8xf32>
    %266 = vector.multi_reduction <add>, %265, %cst_40 [0] : vector<32x8xf32> to vector<8xf32>
    %267 = vector.shape_cast %266 : vector<8xf32> to vector<1x8xf32>
    %c0_41 = arith.constant 0 : index
    %c0_42 = arith.constant 0 : index
    %268 = vector.load %arg7[%c0_41, %c0_42] : memref<1x8xf32, #tpu.memory_space<vmem>>, vector<1x8xf32>
    tpu.vector_store %arg7[%c0_41, %c0_42], %267 {strides = array<i32>} : memref<1x8xf32, #tpu.memory_space<vmem>>, vector<1x8xf32>,
    return
  }
  func.func @transform_0(%arg0: i32) -> (i32, i32) {
    %c0_i32 = arith.constant 0 : i32
    %c0_i32_0 = arith.constant 0 : i32
    return %c0_i32, %arg0 : i32, i32
  }
  func.func @transform_1(%arg0: i32) -> (i32, i32) {
    %c0_i32 = arith.constant 0 : i32
    %c0_i32_0 = arith.constant 0 : i32
    return %c0_i32, %arg0 : i32, i32
  }
  func.func @transform_2(%arg0: i32) -> (i32, i32) {
    %c0_i32 = arith.constant 0 : i32
    %c0_i32_0 = arith.constant 0 : i32
    return %c0_i32, %arg0 : i32, i32
  }
  func.func @transform_3(%arg0: i32) -> (i32, i32) {
    %c0_i32 = arith.constant 0 : i32
    %c0_i32_0 = arith.constant 0 : i32
    return %c0_i32, %arg0 : i32, i32
  }
  func.func @transform_4(%arg0: i32) -> (i32, i32) {
    %c0_i32 = arith.constant 0 : i32
    %c0_i32_0 = arith.constant 0 : i32
    %c0_i32_1 = arith.constant 0 : i32
    return %c0_i32, %c0_i32_0 : i32, i32
  }
  func.func @transform_5(%arg0: i32) -> i32 {
    %c0_i32 = arith.constant 0 : i32
    %c0_i32_0 = arith.constant 0 : i32
    return %c0_i32 : i32
  }
  func.func @transform_6(%arg0: i32) -> (i32, i32) {
    %c0_i32 = arith.constant 0 : i32
    %c0_i32_0 = arith.constant 0 : i32
    return %c0_i32, %arg0 : i32, i32
  }
}

</mosaic_0001>

<llo_original>
// kernel: tpu_custom_call.1
$region0: #{tpu_custom_call.1}
  #allocation0 [shape = 'u32[]', space=smem, size = 0x4, offset = 0x4, fixed_abs, tag = 'smem constant byte address 0x4 - core index']
  #allocation1 [shape = 'u32[144,128]{1,0:T(1,128)}', space=vmem, size = 0x12000, scoped, tag = 'internal scratch']
  %s0 = inlined_call_operand.vmem [shape: f32[12,8], index: 0, kind: input, shape index: {}]
  %s1 = inlined_call_operand.vmem [shape: f32[32,8], index: 1, kind: input, shape index: {}]
  %s2 = inlined_call_operand.vmem [shape: f32[32,8], index: 2, kind: input, shape index: {}]
  %s3 = inlined_call_operand.vmem [shape: f32[32,8], index: 3, kind: input, shape index: {}]
  %s4 = inlined_call_operand.vmem [shape: f32[32,1], index: 4, kind: input, shape index: {}]
  %s5 = inlined_call_operand.vmem [shape: f32[24], index: 5, kind: input, shape index: {}]
  %s6 = inlined_call_operand.hbm [shape: f32[1,8], index: 6, kind: output, shape index: {}]
  %s7 = sld [smem:[#allocation0]]
  $region38: #{tpu_custom_call.1} parent=0
    _
  %s9 = ssub.s32 1, %s7
  %s10 = scalar_select 0, %s9, %s7
  $region1: #{tpu_custom_call.1} parent=0
    #allocation2 [shape = 'u8[512]{0}', space=smem, size = 0x200, scoped, tag = 'input window, operand 5, single buffered']
    #allocation3 [shape = 's32[1]{0}', space=sflag, size = 0x4, scoped, tag = 'scoped memory for tpu_custom_call.1']
    #allocation4 [shape = 's32[1]{0}', space=sflag, size = 0x4, scoped, tag = 'scoped memory for tpu_custom_call.1']
    #allocation5 [shape = 'u8[512]{0}', space=vmem, size = 0x400, scoped, tag = 'output window, operand 0, single buffered']
    %11 = vsyncpa [#allocation4], 0
    %12 = vsyncpa [#allocation3], 0
    // Predicated region
    $region2: #{tpu_custom_call.1} parent=1 // pred_check
      _
    $region3: #{tpu_custom_call.1} parent=1 // pred_check_branch
      %14 = sbr.rel (0) target = $region5
    $region4: #{tpu_custom_call.1} parent=1 // pred_region
      _
    $region5: #{tpu_custom_call.1} parent=1 // pred_fallthru
      _
    // Predicated region
    $region6: #{tpu_custom_call.1} parent=1 // pred_check
      _
    $region7: #{tpu_custom_call.1} parent=1 // pred_check_branch
      %16 = sbr.rel (0) target = $region9
    $region8: #{tpu_custom_call.1} parent=1 // pred_region
      _
    $region9: #{tpu_custom_call.1} parent=1 // pred_fallthru
      _
    // Predicated region
    $region10: #{tpu_custom_call.1} parent=1 // pred_check
      _
    $region11: #{tpu_custom_call.1} parent=1 // pred_check_branch
      %18 = sbr.rel (0) target = $region13
    $region12: #{tpu_custom_call.1} parent=1 // pred_region
      _
    $region13: #{tpu_custom_call.1} parent=1 // pred_fallthru
      _
    // Predicated region
    $region14: #{tpu_custom_call.1} parent=1 // pred_check
      _
    $region15: #{tpu_custom_call.1} parent=1 // pred_check_branch
      %20 = sbr.rel (0) target = $region17
    $region16: #{tpu_custom_call.1} parent=1 // pred_region
      _
    $region17: #{tpu_custom_call.1} parent=1 // pred_fallthru
      _
    // Predicated region
    $region18: #{tpu_custom_call.1} parent=1 // pred_check
      _
    $region19: #{tpu_custom_call.1} parent=1 // pred_check_branch
      %22 = sbr.rel (0) target = $region21
    $region20: #{tpu_custom_call.1} parent=1 // pred_region
      _
    $region21: #{tpu_custom_call.1} parent=1 // pred_fallthru
      _
    // Predicated region
    $region22: #{tpu_custom_call.1} parent=1 // pred_check
      _
    $region23: #{tpu_custom_call.1} parent=1 // pred_check_branch
      %24 = sbr.rel (0) target = $region25
    $region24: #{tpu_custom_call.1} parent=1 // pred_region
      %s26 = ssub.s32 16, 16
      %27 = vsyncadd [#allocation4], %s26
      %s29 = sshll.u32 %s5, 4
      %s30 = int_to_ptr.vmem [resolvable:$true] %s29
      %32 = dma.vmem_to_smem %s30, 16, [#allocation2], [#allocation4]
    $region25: #{tpu_custom_call.1} parent=1 // pred_fallthru
      _
    // Predicated region
    $region26: #{tpu_custom_call.1} parent=1 // pred_check
      _
    $region27: #{tpu_custom_call.1} parent=1 // pred_check_branch
      %34 = sbr.rel (0) target = $region29
    $region28: #{tpu_custom_call.1} parent=1 // pred_region
      %35 = dma.done [#allocation4], 16
    $region29: #{tpu_custom_call.1} parent=1 // pred_fallthru
      _
    %36 = sfence
    %v37 = vld [vmem:[%s0] sm:$0xff]
    %v38 = vld [vmem:[%s0 + $0x8] sm:$0xf]
    %v39 = vld [vmem:[%s1] sm:$0xff]
    %v40 = vld [vmem:[%s1 + $0x8] sm:$0xff]
    %v41 = vld [vmem:[%s1 + $0x10] sm:$0xff]
    %v42 = vld [vmem:[%s1 + $0x18] sm:$0xff]
    %v43 = vld [vmem:[%s2] sm:$0xff]
    %v44 = vld [vmem:[%s2 + $0x8] sm:$0xff]
    %v45 = vld [vmem:[%s2 + $0x10] sm:$0xff]
    %v46 = vld [vmem:[%s2 + $0x18] sm:$0xff]
    %v47 = vld [vmem:[%s3] sm:$0xff]
    %v48 = vld [vmem:[%s3 + $0x8] sm:$0xff]
    %v49 = vld [vmem:[%s3 + $0x10] sm:$0xff]
    %v50 = vld [vmem:[%s3 + $0x18] sm:$0xff]
    %v51 = vlaneseq
    %v52 = vshrl.u32 %v51, 7
    %v53 = vsub.s32 0, %v52
    %v54 = vrot.slane %v37, %v53
    %v55 = vmul.f32 %v39, %v54
    %v56 = vmul.f32 %v40, %v54
    %v57 = vmul.f32 %v41, %v54
    %v58 = vmul.f32 %v42, %v54
    %v59 = vlaneseq
    %v60 = vshrl.u32 %v59, 7
    %v61 = vsub.s32 1, %v60
    %v62 = vrot.slane %v37, %v61
    %v63 = vmul.f32 %v43, %v62
    %v64 = vmul.f32 %v44, %v62
    %v65 = vmul.f32 %v45, %v62
    %v66 = vmul.f32 %v46, %v62
    %v67 = vadd.f32 %v55, %v63
    %v68 = vadd.f32 %v56, %v64
    %v69 = vadd.f32 %v57, %v65
    %v70 = vadd.f32 %v58, %v66
    %v71 = vlaneseq
    %v72 = vshrl.u32 %v71, 7
    %v73 = vsub.s32 2, %v72
    %v74 = vrot.slane %v37, %v73
    %v75 = vmul.f32 %v47, %v74
    %v76 = vmul.f32 %v48, %v74
    %v77 = vmul.f32 %v49, %v74
    %v78 = vmul.f32 %v50, %v74
    %v79 = vadd.f32 %v67, %v75
    %v80 = vadd.f32 %v68, %v76
    %v81 = vadd.f32 %v69, %v77
    %v82 = vadd.f32 %v70, %v78
    %v83 = vlaneseq
    %v84 = vshrl.u32 %v83, 7
    %v85 = vsub.s32 3, %v84
    %v86 = vrot.slane %v37, %v85
    %v87 = vadd.f32 %v79, %v86
    %v88 = vadd.f32 %v80, %v86
    %v89 = vadd.f32 %v81, %v86
    %v90 = vadd.f32 %v82, %v86
    %v91 = vlaneseq
    %v92 = vshrl.u32 %v91, 7
    %v93 = vsub.s32 4, %v92
    %v94 = vrot.slane %v37, %v93
    %v95 = vmul.f32 %v39, %v94
    %v96 = vmul.f32 %v40, %v94
    %v97 = vmul.f32 %v41, %v94
    %v98 = vmul.f32 %v42, %v94
    %v99 = vlaneseq
    %v100 = vshrl.u32 %v99, 7
    %v101 = vsub.s32 5, %v100
    %v102 = vrot.slane %v37, %v101
    %v103 = vmul.f32 %v43, %v102
    %v104 = vmul.f32 %v44, %v102
    %v105 = vmul.f32 %v45, %v102
    %v106 = vmul.f32 %v46, %v102
    %v107 = vadd.f32 %v95, %v103
    %v108 = vadd.f32 %v96, %v104
    %v109 = vadd.f32 %v97, %v105
    %v110 = vadd.f32 %v98, %v106
    %v111 = vlaneseq
    %v112 = vshrl.u32 %v111, 7
    %v113 = vsub.s32 6, %v112
    %v114 = vrot.slane %v37, %v113
    %v115 = vmul.f32 %v47, %v114
    %v116 = vmul.f32 %v48, %v114
    %v117 = vmul.f32 %v49, %v114
    %v118 = vmul.f32 %v50, %v114
    %v119 = vadd.f32 %v107, %v115
    %v120 = vadd.f32 %v108, %v116
    %v121 = vadd.f32 %v109, %v117
    %v122 = vadd.f32 %v110, %v118
    %v123 = vlaneseq
    %v124 = vshrl.u32 %v123, 7
    %v125 = vsub.s32 7, %v124
    %v126 = vrot.slane %v37, %v125
    %v127 = vadd.f32 %v119, %v126
    %v128 = vadd.f32 %v120, %v126
    %v129 = vadd.f32 %v121, %v126
    %v130 = vadd.f32 %v122, %v126
    %v131 = vlaneseq
    %v132 = vshrl.u32 %v131, 7
    %v133 = vsub.s32 0, %v132
    %v134 = vrot.slane %v38, %v133
    %v135 = vmul.f32 %v39, %v134
    %v136 = vmul.f32 %v40, %v134
    %v137 = vmul.f32 %v41, %v134
    %v138 = vmul.f32 %v42, %v134
    %v139 = vlaneseq
    %v140 = vshrl.u32 %v139, 7
    %v141 = vsub.s32 1, %v140
    %v142 = vrot.slane %v38, %v141
    %v143 = vmul.f32 %v43, %v142
    %v144 = vmul.f32 %v44, %v142
    %v145 = vmul.f32 %v45, %v142
    %v146 = vmul.f32 %v46, %v142
    %v147 = vadd.f32 %v135, %v143
    %v148 = vadd.f32 %v136, %v144
    %v149 = vadd.f32 %v137, %v145
    %v150 = vadd.f32 %v138, %v146
    %v151 = vlaneseq
    %v152 = vshrl.u32 %v151, 7
    %v153 = vsub.s32 2, %v152
    %v154 = vrot.slane %v38, %v153
    %v155 = vmul.f32 %v47, %v154
    %v156 = vmul.f32 %v48, %v154
    %v157 = vmul.f32 %v49, %v154
    %v158 = vmul.f32 %v50, %v154
    %v159 = vadd.f32 %v147, %v155
    %v160 = vadd.f32 %v148, %v156
    %v161 = vadd.f32 %v149, %v157
    %v162 = vadd.f32 %v150, %v158
    %v163 = vlaneseq
    %v164 = vshrl.u32 %v163, 7
    %v165 = vsub.s32 3, %v164
    %v166 = vrot.slane %v38, %v165
    %v167 = vadd.f32 %v159, %v166
    %v168 = vadd.f32 %v160, %v166
    %v169 = vadd.f32 %v161, %v166
    %v170 = vadd.f32 %v162, %v166
    %s171 = sld [smem:[#allocation2]]
    %s172 = sld [smem:[#allocation2 + $0x8]]
    %s173 = sld [smem:[#allocation2 + $0x10]]
    %v174 = vstv %s171
    %v175 = vsub.f32 %v87, %v174
    %v176 = vsub.f32 %v88, %v174
    %v177 = vsub.f32 %v89, %v174
    %v178 = vsub.f32 %v90, %v174
    %v179 = vstv %s172
    %v180 = vsub.f32 %v127, %v179
    %v181 = vsub.f32 %v128, %v179
    %v182 = vsub.f32 %v129, %v179
    %v183 = vsub.f32 %v130, %v179
    %v184 = vstv %s173
    %v185 = vsub.f32 %v167, %v184
    %v186 = vsub.f32 %v168, %v184
    %v187 = vsub.f32 %v169, %v184
    %v188 = vsub.f32 %v170, %v184
    %v189 = vmul.f32 %v175, %v175
    %v190 = vmul.f32 %v176, %v176
    %v191 = vmul.f32 %v177, %v177
    %v192 = vmul.f32 %v178, %v178
    %v193 = vmul.f32 %v180, %v180
    %v194 = vmul.f32 %v181, %v181
    %v195 = vmul.f32 %v182, %v182
    %v196 = vmul.f32 %v183, %v183
    %v197 = vadd.f32 %v189, %v193
    %v198 = vadd.f32 %v190, %v194
    %v199 = vadd.f32 %v191, %v195
    %v200 = vadd.f32 %v192, %v196
    %v201 = vmul.f32 %v185, %v185
    %v202 = vmul.f32 %v186, %v186
    %v203 = vmul.f32 %v187, %v187
    %v204 = vmul.f32 %v188, %v188
    %v205 = vadd.f32 %v197, %v201
    %v206 = vadd.f32 %v198, %v202
    %v207 = vadd.f32 %v199, %v203
    %v208 = vadd.f32 %v200, %v204
    %v209 = vadd.f32 %v205, 1e-30
    %v210 = vadd.f32 %v206, 1e-30
    %v211 = vadd.f32 %v207, 1e-30
    %v212 = vadd.f32 %v208, 1e-30
    %v213 = vrsqrt.pop %v209
    %v214 = vrsqrt.pop %v210
    %v215 = vrsqrt.pop %v211
    %v216 = vrsqrt.pop %v212
    %v217 = vmul.f32 %v205, %v213
    %v218 = vmul.f32 %v206, %v214
    %v219 = vmul.f32 %v207, %v215
    %v220 = vmul.f32 %v208, %v216
    %v221 = vsub.f32 0.0, %v217
    %v222 = vsub.f32 0.0, %v218
    %v223 = vsub.f32 0.0, %v219
    %v224 = vsub.f32 0.0, %v220
    %v225 = vmul.f32 %v221, 1.442695
    %v226 = vpow.pop %v225
    %v227 = vmul.f32 %v222, 1.442695
    %v228 = vpow.pop %v227
    %v229 = vmul.f32 %v223, 1.442695
    %v230 = vpow.pop %v229
    %v231 = vmul.f32 %v224, 1.442695
    %v232 = vpow.pop %v231
    %v233 = vadd.f32 %v226, 0.0
    %v234 = vadd.f32 %v228, 0.0
    %v235 = vadd.f32 %v230, 0.0
    %v236 = vadd.f32 %v232, 0.0
    %s237 = sld [smem:[#allocation2 + $0x1]]
    %s238 = sld [smem:[#allocation2 + $0x9]]
    %s239 = sld [smem:[#allocation2 + $0x11]]
    %v240 = vstv %s237
    %v241 = vsub.f32 %v87, %v240
    %v242 = vsub.f32 %v88, %v240
    %v243 = vsub.f32 %v89, %v240
    %v244 = vsub.f32 %v90, %v240
    %v245 = vstv %s238
    %v246 = vsub.f32 %v127, %v245
    %v247 = vsub.f32 %v128, %v245
    %v248 = vsub.f32 %v129, %v245
    %v249 = vsub.f32 %v130, %v245
    %v250 = vstv %s239
    %v251 = vsub.f32 %v167, %v250
    %v252 = vsub.f32 %v168, %v250
    %v253 = vsub.f32 %v169, %v250
    %v254 = vsub.f32 %v170, %v250
    %v255 = vmul.f32 %v241, %v241
    %v256 = vmul.f32 %v242, %v242
    %v257 = vmul.f32 %v243, %v243
    %v258 = vmul.f32 %v244, %v244
    %v259 = vmul.f32 %v246, %v246
    %v260 = vmul.f32 %v247, %v247
    %v261 = vmul.f32 %v248, %v248
    %v262 = vmul.f32 %v249, %v249
    %v263 = vadd.f32 %v255, %v259
    %v264 = vadd.f32 %v256, %v260
    %v265 = vadd.f32 %v257, %v261
    %v266 = vadd.f32 %v258, %v262
    %v267 = vmul.f32 %v251, %v251
    %v268 = vmul.f32 %v252, %v252
    %v269 = vmul.f32 %v253, %v253
    %v270 = vmul.f32 %v254, %v254
    %v271 = vadd.f32 %v263, %v267
    %v272 = vadd.f32 %v264, %v268
    %v273 = vadd.f32 %v265, %v269
    %v274 = vadd.f32 %v266, %v270
    %v275 = vadd.f32 %v271, 1e-30
    %v276 = vadd.f32 %v272, 1e-30
    %v277 = vadd.f32 %v273, 1e-30
    %v278 = vadd.f32 %v274, 1e-30
    %v279 = vrsqrt.pop %v275
    %v280 = vrsqrt.pop %v276
    %v281 = vrsqrt.pop %v277
    %v282 = vrsqrt.pop %v278
    %v283 = vmul.f32 %v271, %v279
    %v284 = vmul.f32 %v272, %v280
    %v285 = vmul.f32 %v273, %v281
    %v286 = vmul.f32 %v274, %v282
    %v287 = vsub.f32 0.0, %v283
    %v288 = vsub.f32 0.0, %v284
    %v289 = vsub.f32 0.0, %v285
    %v290 = vsub.f32 0.0, %v286
    %v291 = vmul.f32 %v287, 1.442695
    %v292 = vpow.pop %v291
    %v293 = vmul.f32 %v288, 1.442695
    %v294 = vpow.pop %v293
    %v295 = vmul.f32 %v289, 1.442695
    %v296 = vpow.pop %v295
    %v297 = vmul.f32 %v290, 1.442695
    %v298 = vpow.pop %v297
    %v299 = vadd.f32 %v233, %v292
    %v300 = vadd.f32 %v234, %v294
    %v301 = vadd.f32 %v235, %v296
    %v302 = vadd.f32 %v236, %v298
    %s303 = sld [smem:[#allocation2 + $0x2]]
    %s304 = sld [smem:[#allocation2 + $0xa]]
    %s305 = sld [smem:[#allocation2 + $0x12]]
    %v306 = vstv %s303
    %v307 = vsub.f32 %v87, %v306
    %v308 = vsub.f32 %v88, %v306
    %v309 = vsub.f32 %v89, %v306
    %v310 = vsub.f32 %v90, %v306
    %v311 = vstv %s304
    %v312 = vsub.f32 %v127, %v311
    %v313 = vsub.f32 %v128, %v311
    %v314 = vsub.f32 %v129, %v311
    %v315 = vsub.f32 %v130, %v311
    %v316 = vstv %s305
    %v317 = vsub.f32 %v167, %v316
    %v318 = vsub.f32 %v168, %v316
    %v319 = vsub.f32 %v169, %v316
    %v320 = vsub.f32 %v170, %v316
    %v321 = vmul.f32 %v307, %v307
    %v322 = vmul.f32 %v308, %v308
    %v323 = vmul.f32 %v309, %v309
    %v324 = vmul.f32 %v310, %v310
    %v325 = vmul.f32 %v312, %v312
    %v326 = vmul.f32 %v313, %v313
    %v327 = vmul.f32 %v314, %v314
    %v328 = vmul.f32 %v315, %v315
    %v329 = vadd.f32 %v321, %v325
    %v330 = vadd.f32 %v322, %v326
    %v331 = vadd.f32 %v323, %v327
    %v332 = vadd.f32 %v324, %v328
    %v333 = vmul.f32 %v317, %v317
    %v334 = vmul.f32 %v318, %v318
    %v335 = vmul.f32 %v319, %v319
    %v336 = vmul.f32 %v320, %v320
    %v337 = vadd.f32 %v329, %v333
    %v338 = vadd.f32 %v330, %v334
    %v339 = vadd.f32 %v331, %v335
    %v340 = vadd.f32 %v332, %v336
    %v341 = vadd.f32 %v337, 1e-30
    %v342 = vadd.f32 %v338, 1e-30
    %v343 = vadd.f32 %v339, 1e-30
    %v344 = vadd.f32 %v340, 1e-30
    %v345 = vrsqrt.pop %v341
    %v346 = vrsqrt.pop %v342
    %v347 = vrsqrt.pop %v343
    %v348 = vrsqrt.pop %v344
    %v349 = vmul.f32 %v337, %v345
    %v350 = vmul.f32 %v338, %v346
    %v351 = vmul.f32 %v339, %v347
    %v352 = vmul.f32 %v340, %v348
    %v353 = vsub.f32 0.0, %v349
    %v354 = vsub.f32 0.0, %v350
    %v355 = vsub.f32 0.0, %v351
    %v356 = vsub.f32 0.0, %v352
    %v357 = vmul.f32 %v353, 1.442695
    %v358 = vpow.pop %v357
    %v359 = vmul.f32 %v354, 1.442695
    %v360 = vpow.pop %v359
    %v361 = vmul.f32 %v355, 1.442695
    %v362 = vpow.pop %v361
    %v363 = vmul.f32 %v356, 1.442695
    %v364 = vpow.pop %v363
    %v365 = vadd.f32 %v299, %v358
    %v366 = vadd.f32 %v300, %v360
    %v367 = vadd.f32 %v301, %v362
    %v368 = vadd.f32 %v302, %v364
    %s369 = sld [smem:[#allocation2 + $0x3]]
    %s370 = sld [smem:[#allocation2 + $0xb]]
    %s371 = sld [smem:[#allocation2 + $0x13]]
    %v372 = vstv %s369
    %v373 = vsub.f32 %v87, %v372
    %v374 = vsub.f32 %v88, %v372
    %v375 = vsub.f32 %v89, %v372
    %v376 = vsub.f32 %v90, %v372
    %v377 = vstv %s370
    %v378 = vsub.f32 %v127, %v377
    %v379 = vsub.f32 %v128, %v377
    %v380 = vsub.f32 %v129, %v377
    %v381 = vsub.f32 %v130, %v377
    %v382 = vstv %s371
    %v383 = vsub.f32 %v167, %v382
    %v384 = vsub.f32 %v168, %v382
    %v385 = vsub.f32 %v169, %v382
    %v386 = vsub.f32 %v170, %v382
    %v387 = vmul.f32 %v373, %v373
    %v388 = vmul.f32 %v374, %v374
    %v389 = vmul.f32 %v375, %v375
    %v390 = vmul.f32 %v376, %v376
    %v391 = vmul.f32 %v378, %v378
    %v392 = vmul.f32 %v379, %v379
    %v393 = vmul.f32 %v380, %v380
    %v394 = vmul.f32 %v381, %v381
    %v395 = vadd.f32 %v387, %v391
    %v396 = vadd.f32 %v388, %v392
    %v397 = vadd.f32 %v389, %v393
    %v398 = vadd.f32 %v390, %v394
    %v399 = vmul.f32 %v383, %v383
    %v400 = vmul.f32 %v384, %v384
    %v401 = vmul.f32 %v385, %v385
    %v402 = vmul.f32 %v386, %v386
    %v403 = vadd.f32 %v395, %v399
    %v404 = vadd.f32 %v396, %v400
    %v405 = vadd.f32 %v397, %v401
    %v406 = vadd.f32 %v398, %v402
    %v407 = vadd.f32 %v403, 1e-30
    %v408 = vadd.f32 %v404, 1e-30
    %v409 = vadd.f32 %v405, 1e-30
    %v410 = vadd.f32 %v406, 1e-30
    %v411 = vrsqrt.pop %v407
    %v412 = vrsqrt.pop %v408
    %v413 = vrsqrt.pop %v409
    %v414 = vrsqrt.pop %v410
    %v415 = vmul.f32 %v403, %v411
    %v416 = vmul.f32 %v404, %v412
    %v417 = vmul.f32 %v405, %v413
    %v418 = vmul.f32 %v406, %v414
    %v419 = vsub.f32 0.0, %v415
    %v420 = vsub.f32 0.0, %v416
    %v421 = vsub.f32 0.0, %v417
    %v422 = vsub.f32 0.0, %v418
    %v423 = vmul.f32 %v419, 1.442695
    %v424 = vpow.pop %v423
    %v425 = vmul.f32 %v420, 1.442695
    %v426 = vpow.pop %v425
    %v427 = vmul.f32 %v421, 1.442695
    %v428 = vpow.pop %v427
    %v429 = vmul.f32 %v422, 1.442695
    %v430 = vpow.pop %v429
    %v431 = vadd.f32 %v365, %v424
    %v432 = vadd.f32 %v366, %v426
    %v433 = vadd.f32 %v367, %v428
    %v434 = vadd.f32 %v368, %v430
    %s435 = sld [smem:[#allocation2 + $0x4]]
    %s436 = sld [smem:[#allocation2 + $0xc]]
    %s437 = sld [smem:[#allocation2 + $0x14]]
    %v438 = vstv %s435
    %v439 = vsub.f32 %v87, %v438
    %v440 = vsub.f32 %v88, %v438
    %v441 = vsub.f32 %v89, %v438
    %v442 = vsub.f32 %v90, %v438
    %v443 = vstv %s436
    %v444 = vsub.f32 %v127, %v443
    %v445 = vsub.f32 %v128, %v443
    %v446 = vsub.f32 %v129, %v443
    %v447 = vsub.f32 %v130, %v443
    %v448 = vstv %s437
    %v449 = vsub.f32 %v167, %v448
    %v450 = vsub.f32 %v168, %v448
    %v451 = vsub.f32 %v169, %v448
    %v452 = vsub.f32 %v170, %v448
    %v453 = vmul.f32 %v439, %v439
    %v454 = vmul.f32 %v440, %v440
    %v455 = vmul.f32 %v441, %v441
    %v456 = vmul.f32 %v442, %v442
    %v457 = vmul.f32 %v444, %v444
    %v458 = vmul.f32 %v445, %v445
    %v459 = vmul.f32 %v446, %v446
    %v460 = vmul.f32 %v447, %v447
    %v461 = vadd.f32 %v453, %v457
    %v462 = vadd.f32 %v454, %v458
    %v463 = vadd.f32 %v455, %v459
    %v464 = vadd.f32 %v456, %v460
    %v465 = vmul.f32 %v449, %v449
    %v466 = vmul.f32 %v450, %v450
    %v467 = vmul.f32 %v451, %v451
    %v468 = vmul.f32 %v452, %v452
    %v469 = vadd.f32 %v461, %v465
    %v470 = vadd.f32 %v462, %v466
    %v471 = vadd.f32 %v463, %v467
    %v472 = vadd.f32 %v464, %v468
    %v473 = vadd.f32 %v469, 1e-30
    %v474 = vadd.f32 %v470, 1e-30
    %v475 = vadd.f32 %v471, 1e-30
    %v476 = vadd.f32 %v472, 1e-30
    %v477 = vrsqrt.pop %v473
    %v478 = vrsqrt.pop %v474
    %v479 = vrsqrt.pop %v475
    %v480 = vrsqrt.pop %v476
    %v481 = vmul.f32 %v469, %v477
    %v482 = vmul.f32 %v470, %v478
    %v483 = vmul.f32 %v471, %v479
    %v484 = vmul.f32 %v472, %v480
    %v485 = vsub.f32 0.0, %v481
    %v486 = vsub.f32 0.0, %v482
    %v487 = vsub.f32 0.0, %v483
    %v488 = vsub.f32 0.0, %v484
    %v489 = vmul.f32 %v485, 1.442695
    %v490 = vpow.pop %v489
    %v491 = vmul.f32 %v486, 1.442695
    %v492 = vpow.pop %v491
    %v493 = vmul.f32 %v487, 1.442695
    %v494 = vpow.pop %v493
    %v495 = vmul.f32 %v488, 1.442695
    %v496 = vpow.pop %v495
    %v497 = vadd.f32 %v431, %v490
    %v498 = vadd.f32 %v432, %v492
    %v499 = vadd.f32 %v433, %v494
    %v500 = vadd.f32 %v434, %v496
    %s501 = sld [smem:[#allocation2 + $0x5]]
    %s502 = sld [smem:[#allocation2 + $0xd]]
    %s503 = sld [smem:[#allocation2 + $0x15]]
    %v504 = vstv %s501
    %v505 = vsub.f32 %v87, %v504
    %v506 = vsub.f32 %v88, %v504
    %v507 = vsub.f32 %v89, %v504
    %v508 = vsub.f32 %v90, %v504
    %v509 = vstv %s502
    %v510 = vsub.f32 %v127, %v509
    %v511 = vsub.f32 %v128, %v509
    %v512 = vsub.f32 %v129, %v509
    %v513 = vsub.f32 %v130, %v509
    %v514 = vstv %s503
    %v515 = vsub.f32 %v167, %v514
    %v516 = vsub.f32 %v168, %v514
    %v517 = vsub.f32 %v169, %v514
    %v518 = vsub.f32 %v170, %v514
    %v519 = vmul.f32 %v505, %v505
    %v520 = vmul.f32 %v506, %v506
    %v521 = vmul.f32 %v507, %v507
    %v522 = vmul.f32 %v508, %v508
    %v523 = vmul.f32 %v510, %v510
    %v524 = vmul.f32 %v511, %v511
    %v525 = vmul.f32 %v512, %v512
    %v526 = vmul.f32 %v513, %v513
    %v527 = vadd.f32 %v519, %v523
    %v528 = vadd.f32 %v520, %v524
    %v529 = vadd.f32 %v521, %v525
    %v530 = vadd.f32 %v522, %v526
    %v531 = vmul.f32 %v515, %v515
    %v532 = vmul.f32 %v516, %v516
    %v533 = vmul.f32 %v517, %v517
    %v534 = vmul.f32 %v518, %v518
    %v535 = vadd.f32 %v527, %v531
    %v536 = vadd.f32 %v528, %v532
    %v537 = vadd.f32 %v529, %v533
    %v538 = vadd.f32 %v530, %v534
    %v539 = vadd.f32 %v535, 1e-30
    %v540 = vadd.f32 %v536, 1e-30
    %v541 = vadd.f32 %v537, 1e-30
    %v542 = vadd.f32 %v538, 1e-30
    %v543 = vrsqrt.pop %v539
    %v544 = vrsqrt.pop %v540
    %v545 = vrsqrt.pop %v541
    %v546 = vrsqrt.pop %v542
    %v547 = vmul.f32 %v535, %v543
    %v548 = vmul.f32 %v536, %v544
    %v549 = vmul.f32 %v537, %v545
    %v550 = vmul.f32 %v538, %v546
    %v551 = vsub.f32 0.0, %v547
    %v552 = vsub.f32 0.0, %v548
    %v553 = vsub.f32 0.0, %v549
    %v554 = vsub.f32 0.0, %v550
    %v555 = vmul.f32 %v551, 1.442695
    %v556 = vpow.pop %v555
    %v557 = vmul.f32 %v552, 1.442695
    %v558 = vpow.pop %v557
    %v559 = vmul.f32 %v553, 1.442695
    %v560 = vpow.pop %v559
    %v561 = vmul.f32 %v554, 1.442695
    %v562 = vpow.pop %v561
    %v563 = vadd.f32 %v497, %v556
    %v564 = vadd.f32 %v498, %v558
    %v565 = vadd.f32 %v499, %v560
    %v566 = vadd.f32 %v500, %v562
    %s567 = sld [smem:[#allocation2 + $0x6]]
    %s568 = sld [smem:[#allocation2 + $0xe]]
    %s569 = sld [smem:[#allocation2 + $0x16]]
    %v570 = vstv %s567
    %v571 = vsub.f32 %v87, %v570
    %v572 = vsub.f32 %v88, %v570
    %v573 = vsub.f32 %v89, %v570
    %v574 = vsub.f32 %v90, %v570
    %v575 = vstv %s568
    %v576 = vsub.f32 %v127, %v575
    %v577 = vsub.f32 %v128, %v575
    %v578 = vsub.f32 %v129, %v575
    %v579 = vsub.f32 %v130, %v575
    %v580 = vstv %s569
    %v581 = vsub.f32 %v167, %v580
    %v582 = vsub.f32 %v168, %v580
    %v583 = vsub.f32 %v169, %v580
    %v584 = vsub.f32 %v170, %v580
    %v585 = vmul.f32 %v571, %v571
    %v586 = vmul.f32 %v572, %v572
    %v587 = vmul.f32 %v573, %v573
    %v588 = vmul.f32 %v574, %v574
    %v589 = vmul.f32 %v576, %v576
    %v590 = vmul.f32 %v577, %v577
    %v591 = vmul.f32 %v578, %v578
    %v592 = vmul.f32 %v579, %v579
    %v593 = vadd.f32 %v585, %v589
    %v594 = vadd.f32 %v586, %v590
    %v595 = vadd.f32 %v587, %v591
    %v596 = vadd.f32 %v588, %v592
    %v597 = vmul.f32 %v581, %v581
    %v598 = vmul.f32 %v582, %v582
    %v599 = vmul.f32 %v583, %v583
    %v600 = vmul.f32 %v584, %v584
    %v601 = vadd.f32 %v593, %v597
    %v602 = vadd.f32 %v594, %v598
    %v603 = vadd.f32 %v595, %v599
    %v604 = vadd.f32 %v596, %v600
    %v605 = vadd.f32 %v601, 1e-30
    %v606 = vadd.f32 %v602, 1e-30
    %v607 = vadd.f32 %v603, 1e-30
    %v608 = vadd.f32 %v604, 1e-30
    %v609 = vrsqrt.pop %v605
    %v610 = vrsqrt.pop %v606
    %v611 = vrsqrt.pop %v607
    %v612 = vrsqrt.pop %v608
    %v613 = vmul.f32 %v601, %v609
    %v614 = vmul.f32 %v602, %v610
    %v615 = vmul.f32 %v603, %v611
    %v616 = vmul.f32 %v604, %v612
    %v617 = vsub.f32 0.0, %v613
    %v618 = vsub.f32 0.0, %v614
    %v619 = vsub.f32 0.0, %v615
    %v620 = vsub.f32 0.0, %v616
    %v621 = vmul.f32 %v617, 1.442695
    %v622 = vpow.pop %v621
    %v623 = vmul.f32 %v618, 1.442695
    %v624 = vpow.pop %v623
    %v625 = vmul.f32 %v619, 1.442695
    %v626 = vpow.pop %v625
    %v627 = vmul.f32 %v620, 1.442695
    %v628 = vpow.pop %v627
    %v629 = vadd.f32 %v563, %v622
    %v630 = vadd.f32 %v564, %v624
    %v631 = vadd.f32 %v565, %v626
    %v632 = vadd.f32 %v566, %v628
    %s633 = sld [smem:[#allocation2 + $0x7]]
    %s634 = sld [smem:[#allocation2 + $0xf]]
    %s635 = sld [smem:[#allocation2 + $0x17]]
    %v636 = vstv %s633
    %v637 = vsub.f32 %v87, %v636
    %v638 = vsub.f32 %v88, %v636
    %v639 = vsub.f32 %v89, %v636
    %v640 = vsub.f32 %v90, %v636
    %v641 = vstv %s634
    %v642 = vsub.f32 %v127, %v641
    %v643 = vsub.f32 %v128, %v641
    %v644 = vsub.f32 %v129, %v641
    %v645 = vsub.f32 %v130, %v641
    %v646 = vstv %s635
    %v647 = vsub.f32 %v167, %v646
    %v648 = vsub.f32 %v168, %v646
    %v649 = vsub.f32 %v169, %v646
    %v650 = vsub.f32 %v170, %v646
    %v651 = vmul.f32 %v637, %v637
    %v652 = vmul.f32 %v638, %v638
    %v653 = vmul.f32 %v639, %v639
    %v654 = vmul.f32 %v640, %v640
    %v655 = vmul.f32 %v642, %v642
    %v656 = vmul.f32 %v643, %v643
    %v657 = vmul.f32 %v644, %v644
    %v658 = vmul.f32 %v645, %v645
    %v659 = vadd.f32 %v651, %v655
    %v660 = vadd.f32 %v652, %v656
    %v661 = vadd.f32 %v653, %v657
    %v662 = vadd.f32 %v654, %v658
    %v663 = vmul.f32 %v647, %v647
    %v664 = vmul.f32 %v648, %v648
    %v665 = vmul.f32 %v649, %v649
    %v666 = vmul.f32 %v650, %v650
    %v667 = vadd.f32 %v659, %v663
    %v668 = vadd.f32 %v660, %v664
    %v669 = vadd.f32 %v661, %v665
    %v670 = vadd.f32 %v662, %v666
    %v671 = vadd.f32 %v667, 1e-30
    %v672 = vadd.f32 %v668, 1e-30
    %v673 = vadd.f32 %v669, 1e-30
    %v674 = vadd.f32 %v670, 1e-30
    %v675 = vrsqrt.pop %v671
    %v676 = vrsqrt.pop %v672
    %v677 = vrsqrt.pop %v673
    %v678 = vrsqrt.pop %v674
    %v679 = vmul.f32 %v667, %v675
    %v680 = vmul.f32 %v668, %v676
    %v681 = vmul.f32 %v669, %v677
    %v682 = vmul.f32 %v670, %v678
    %v683 = vsub.f32 0.0, %v679
    %v684 = vsub.f32 0.0, %v680
    %v685 = vsub.f32 0.0, %v681
    %v686 = vsub.f32 0.0, %v682
    %v687 = vmul.f32 %v683, 1.442695
    %v688 = vpow.pop %v687
    %v689 = vmul.f32 %v684, 1.442695
    %v690 = vpow.pop %v689
    %v691 = vmul.f32 %v685, 1.442695
    %v692 = vpow.pop %v691
    %v693 = vmul.f32 %v686, 1.442695
    %v694 = vpow.pop %v693
    %v695 = vadd.f32 %v629, %v688
    %v696 = vadd.f32 %v630, %v690
    %v697 = vadd.f32 %v631, %v692
    %v698 = vadd.f32 %v632, %v694
    %v699 = vld [vmem:[%s4] sm:$0xff]
    %v700 = vld [vmem:[%s4 + $0x8] sm:$0xff]
    %v701 = vld [vmem:[%s4 + $0x10] sm:$0xff]
    %v702 = vld [vmem:[%s4 + $0x18] sm:$0xff]
    %704 = vset.pattern.permute.xlu0 0
    %705 = vperm.xlu0 %704, %v699
    %v706 = vpop.permute.xlu0 %705
    %709 = vset.pattern.permute.xlu0 0
    %710 = vperm.xlu0 %709, %v700
    %v711 = vpop.permute.xlu0 %710
    %714 = vset.pattern.permute.xlu0 0
    %715 = vperm.xlu0 %714, %v701
    %v716 = vpop.permute.xlu0 %715
    %719 = vset.pattern.permute.xlu0 0
    %720 = vperm.xlu0 %719, %v702
    %v721 = vpop.permute.xlu0 %720
    %v723 = vmul.f32 %v695, %v706
    %v724 = vmul.f32 %v696, %v711
    %v725 = vmul.f32 %v697, %v716
    %v726 = vmul.f32 %v698, %v721
    %vm727 = vcmask 64512
    %v728 = vsel %vm727, %v723, 0.0
    %v729 = vsel %vm727, %v724, 0.0
    %v730 = vadd.f32 %v728, %v729
    %v731 = vsel %vm727, %v725, 0.0
    %v732 = vadd.f32 %v730, %v731
    %v733 = vsel %vm727, %v726, 0.0
    %v734 = vadd.f32 %v732, %v733
    %v735 = vrot.slane %v734, 4
    %v736 = vadd.f32 %v734, %v735
    %v737 = vrot.slane %v736, 2
    %v738 = vadd.f32 %v736, %v737
    %v739 = vrot.slane %v738, 1
    %v740 = vadd.f32 %v738, %v739
    %vm741 = vcmask 57344
    %742 = vst.msk [vmem:[#allocation5] sm:$0x1] %vm741, %v740
    // Predicated region
    $region30: #{tpu_custom_call.1} parent=1 // pred_check
      _
    $region31: #{tpu_custom_call.1} parent=1 // pred_check_branch
      %744 = sbr.rel (0) target = $region33
    $region32: #{tpu_custom_call.1} parent=1 // pred_region
      %s746 = ssub.s32 16, 16
      %747 = vsyncadd [#allocation3], %s746
      %s749 = sshll.u32 [#allocation5], 4
      %s750 = int_to_ptr.vmem [resolvable:$true] %s749
      %752 = dma.vmem_to_hbm [thread:$0]  %s750, 16, %s6, [#allocation3]
    $region33: #{tpu_custom_call.1} parent=1 // pred_fallthru
      _
    // Predicated region
    $region34: #{tpu_custom_call.1} parent=1 // pred_check
      _
    $region35: #{tpu_custom_call.1} parent=1 // pred_check_branch
      %754 = sbr.rel (0) target = $region37
    $region36: #{tpu_custom_call.1} parent=1 // pred_region
      %755 = dma.done [#allocation3], 16
    $region37: #{tpu_custom_call.1} parent=1 // pred_fallthru
      _
    %756 = vsyncpa [#allocation3], 1
    %757 = vsyncpa [#allocation4], 1

</llo_original>
